<compile_context>
chip_gen: v7x
topology: tpu7x:2x2x1
jax: 0.10.0
libtpu: 0.0.40
codegen_flags: <defaults>
</compile_context>

<pallas_src>
import functools

import jax
import jax.numpy as jnp
from jax.experimental import pallas as pl
from jax.experimental.pallas import tpu as pltpu


_OUT_ROW_VMEM = 512  # a (tile_b, 1) f32 VMEM block pads lanes to 128 -> 512 B/row


def _round_up(n, m):
    return ((n + m - 1) // m) * m


def _memory_budgets():
    """Generation-aware (in-flight x+out pipeline budget, vmem_limit cap)."""
    cap = 64 << 20  # conservative default: v7x-class (64 MiB per TensorCore)
    try:
        cap = int(getattr(pltpu.get_tpu_info(), "vmem_capacity_bytes", cap)) or cap
    except Exception:
        pass
    if cap > (64 << 20):            # v5e / v6e: 128 MiB physical VMEM per core
        return 64 << 20, 100 << 20
    return 32 << 20, 40 << 20       # v7x (or unknown backend): stay well inside 64 MiB


def _pick_tiling(batch, dim, itemsize, pipeline_budget):
    """Choose (tile_b, num_tiles, b_pad): multi-MiB tiles, always >= 2 grid steps."""
    # Per-row VMEM cost: x row (double-buffered) + padded f32 output row (double-buffered).
    row_bytes = dim * itemsize + _OUT_ROW_VMEM
    rows = max(8, (pipeline_budget // (2 * row_bytes)) // 8 * 8)
    # Never exceed half the batch: >= 2 grid steps so the "parallel" axis
    # actually lands on both TensorCores (v7x megacore).
    half = max(8, _round_up(pl.cdiv(batch, 2), 8))
    tile_b = min(rows, half)
    num_tiles = max(2, pl.cdiv(batch, tile_b))
    tile_b = max(8, _round_up(pl.cdiv(batch, num_tiles), 8))  # rebalance -> minimal padding
    return tile_b, num_tiles, num_tiles * tile_b


def _logreg_kernel(x_ref, w_ref, b_ref, o_ref, *, use_mxu):
    # x_ref: (TB, D) input dtype   w_ref: (1, D)   b_ref: (1,) f32 in SMEM
    # o_ref: (TB, 1) f32
    x = x_ref[...]
    w = w_ref[...]
    if use_mxu:
        # MXU contraction x @ w.T -> (TB, 1), f32 accumulation. bf16 inputs stay
        # bf16 (no VPU upcast); no per-row XLU cross-lane reduce.
        z = jax.lax.dot_general(x, w, (((1,), (1,)), ((), ())),
                                preferred_element_type=jnp.float32)
    else:
        # Unaligned feature dim: f32 upcast + VPU multiply + XLU lane reduce.
        z = jnp.sum(x.astype(jnp.float32) * w.astype(jnp.float32),
                    axis=-1, keepdims=True)
    o_ref[...] = jax.nn.sigmoid(z + b_ref[0]).astype(o_ref.dtype)


def logistic_regression_forward(x, weight, bias, *, tile_b=None):
    """x: [B, D] (f32 or bf16), weight: [1, D], bias: [1] -> sigmoid(x @ W.T + b): [B, 1] f32."""
    B, D = x.shape
    itemsize = jnp.dtype(x.dtype).itemsize
    pipeline_budget, vmem_cap = _memory_budgets()

    if tile_b is None:
        tile_b, num_tiles, b_pad = _pick_tiling(B, D, itemsize, pipeline_budget)
    else:
        tile_b = max(8, (int(tile_b) // 8) * 8)
        num_tiles = max(2, pl.cdiv(B, tile_b))   # keep both TCs busy on v7x
        b_pad = num_tiles * tile_b

    if b_pad != B:                   # ragged batch: pad rows, results sliced off below
        x = jnp.pad(x, ((0, b_pad - B), (0, 0)))

    use_mxu = (D % 128 == 0)
    # MXU path: keep W in x's dtype (bf16 stays bf16, f32 accumulation on the MXU).
    # VPU fallback upcasts to f32 inside the kernel, so keep W in f32 there.
    w = weight.reshape(1, D).astype(x.dtype if use_mxu else jnp.float32)
    b = bias.reshape(1).astype(jnp.float32)
    w_itemsize = jnp.dtype(w.dtype).itemsize

    # Honest VMEM accounting (all buffers double-buffered by the pipeline):
    vmem_need = (2 * tile_b * D * itemsize            # x tiles (dominant)
                 + 2 * tile_b * _OUT_ROW_VMEM         # (tile_b,1) f32 out: lanes pad to 128
                 + 2 * pl.cdiv(D, 128) * 4096         # (1,D) weight: pads to full (8,128) tiles
                 + (2 << 20))                         # headroom
    vmem_limit = int(min(max(vmem_need, 16 << 20), vmem_cap))

    out = pl.pallas_call(
        functools.partial(_logreg_kernel, use_mxu=use_mxu),
        out_shape=jax.ShapeDtypeStruct((b_pad, 1), jnp.float32),
        grid_spec=pltpu.PrefetchScalarGridSpec(
            num_scalar_prefetch=0,
            grid=(num_tiles,),
            in_specs=[
                pl.BlockSpec((tile_b, D), lambda i: (i, 0)),
                pl.BlockSpec((1, D), lambda i: (0, 0)),
                pl.BlockSpec(memory_space=pltpu.MemorySpace.SMEM),
            ],
            out_specs=pl.BlockSpec((tile_b, 1), lambda i: (i, 0)),
        ),
        compiler_params=pltpu.CompilerParams(
            dimension_semantics=("parallel",),   # batch axis -> both TCs on v7x
            vmem_limit_bytes=vmem_limit,
        ),
        cost_estimate=pl.CostEstimate(
            flops=2 * b_pad * D,
            transcendentals=b_pad,
            bytes_accessed=b_pad * D * itemsize + D * w_itemsize + b_pad * 4,
        ),
    )(x, w, b)

    return out[:B]


def reference_forward(x, weight, bias):
    z = jnp.dot(x.astype(jnp.float32), weight.astype(jnp.float32).T,
                precision=jax.lax.Precision.HIGHEST) + bias.astype(jnp.float32)
    return jax.nn.sigmoid(z)


if __name__ == "__main__":
    key = jax.random.PRNGKey(0)
    kx, kw, kb, kx2, kw2, kb2 = jax.random.split(key, 6)

    # --- test 1: tiny f32 batch, unaligned D=32 -> VPU-reduce path, forced 2-tile grid
    batch, input_dim = 8, 32
    x = jax.random.normal(kx, (batch, input_dim), dtype=jnp.float32)
    bound = 1.0 / jnp.sqrt(jnp.float32(input_dim))
    weight = jax.random.uniform(kw, (1, input_dim), jnp.float32, -bound, bound)
    bias = jax.random.uniform(kb, (1,), jnp.float32, -bound, bound)

    out = jax.block_until_ready(logistic_regression_forward(x, weight, bias))
    ref = reference_forward(x, weight, bias)
    assert out.shape == (batch, 1)
    assert jnp.allclose(out, ref, atol=1e-5, rtol=1e-5)

    # --- test 2: ragged bf16 batch, lane-aligned D=256 -> MXU path, auto tiling
    batch2, input_dim2 = 300, 256
    x2 = jax.random.normal(kx2, (batch2, input_dim2), jnp.float32).astype(jnp.bfloat16)
    bound2 = 1.0 / jnp.sqrt(jnp.float32(input_dim2))
    weight2 = jax.random.uniform(kw2, (1, input_dim2), jnp.float32, -bound2, bound2)
    bias2 = jax.random.uniform(kb2, (1,), jnp.float32, -bound2, bound2)

    out2 = jax.block_until_ready(logistic_regression_forward(x2, weight2, bias2))
    ref2 = reference_forward(x2, weight2, bias2)
    assert out2.shape == (batch2, 1)
    # bf16 end-to-end (x and W streamed in bf16, f32 MXU accumulation) vs f32 reference.
    assert jnp.allclose(out2, ref2, atol=2e-3, rtol=2e-3)

    print("KERNEL_OK")
</pallas_src>

<mosaic_0001>
module attributes {stable_mosaic.version = 11 : i64} {
  func.func @_logreg_kernel(%arg0: i32, %arg1: memref<8x32xf32, #tpu.memory_space<vmem>>, %arg2: memref<1x32xf32, #tpu.memory_space<vmem>>, %arg3: memref<1xf32, #tpu.memory_space<smem>>, %arg4: memref<8x1xf32, #tpu.memory_space<vmem>>) attributes {dimension_semantics = [#tpu.dimension_semantics<parallel>], iteration_bounds = array<i64: 2>, scalar_prefetch = 0 : i64, scratch_operands = 0 : i64, tpu.core_type = #tpu.core_type<tc>, window_params = [{transform_indices = @transform_0, window_bounds = array<i64: 8, 32>}, {pipeline_mode = #tpu.pipeline_mode<synchronous>, transform_indices = @transform_1, window_bounds = array<i64: 1, 32>}, {transform_indices = @transform_2, window_bounds = array<i64: 1>}, {transform_indices = @transform_3, window_bounds = array<i64: 8, 1>}]} {
    %c0 = arith.constant 0 : index
    %c0_0 = arith.constant 0 : index
    %0 = vector.load %arg1[%c0, %c0_0] : memref<8x32xf32, #tpu.memory_space<vmem>>, vector<8x32xf32>
    %c0_1 = arith.constant 0 : index
    %c0_2 = arith.constant 0 : index
    %1 = vector.load %arg2[%c0_1, %c0_2] : memref<1x32xf32, #tpu.memory_space<vmem>>, vector<1x32xf32>
    %2 = vector.broadcast %1 : vector<1x32xf32> to vector<8x32xf32>
    %3 = arith.mulf %0, %2 : vector<8x32xf32>
    %cst = arith.constant dense<0.000000e+00> : vector<8xf32>
    %4 = vector.multi_reduction <add>, %3, %cst [1] : vector<8x32xf32> to vector<8xf32>
    %5 = vector.shape_cast %4 : vector<8xf32> to vector<8x1xf32>
    %c0_3 = arith.constant 0 : index
    %6 = memref.load %arg3[%c0_3] : memref<1xf32, #tpu.memory_space<smem>>
    %7 = vector.broadcast %6 : f32 to vector<8x1xf32>
    %8 = arith.addf %5, %7 : vector<8x1xf32>
    %9 = arith.negf %8 : vector<8x1xf32>
    %10 = math.exp %9 : vector<8x1xf32>
    %cst_4 = arith.constant 1.000000e+00 : f32
    %11 = vector.broadcast %cst_4 : f32 to vector<8x1xf32>
    %12 = arith.addf %11, %10 : vector<8x1xf32>
    %13 = arith.divf %11, %12 : vector<8x1xf32>
    %c0_5 = arith.constant 0 : index
    %c0_6 = arith.constant 0 : index
    %14 = vector.load %arg4[%c0_5, %c0_6] : memref<8x1xf32, #tpu.memory_space<vmem>>, vector<8x1xf32>
    tpu.vector_store %arg4[%c0_5, %c0_6], %13 {strides = array<i32>} : memref<8x1xf32, #tpu.memory_space<vmem>>, vector<8x1xf32>,
    return
  }
  func.func @transform_0(%arg0: i32) -> (i32, i32) {
    %c0_i32 = arith.constant 0 : i32
    %c0_i32_0 = arith.constant 0 : i32
    return %arg0, %c0_i32 : i32, i32
  }
  func.func @transform_1(%arg0: i32) -> (i32, i32) {
    %c0_i32 = arith.constant 0 : i32
    %c0_i32_0 = arith.constant 0 : i32
    %c0_i32_1 = arith.constant 0 : i32
    return %c0_i32, %c0_i32_0 : i32, i32
  }
  func.func @transform_2(%arg0: i32) -> i32 {
    %c0_i32 = arith.constant 0 : i32
    %c0_i32_0 = arith.constant 0 : i32
    return %c0_i32 : i32
  }
  func.func @transform_3(%arg0: i32) -> (i32, i32) {
    %c0_i32 = arith.constant 0 : i32
    %c0_i32_0 = arith.constant 0 : i32
    return %arg0, %c0_i32 : i32, i32
  }
}

</mosaic_0001>

<llo_original>
// kernel: tpu_custom_call.1
$region0: #{tpu_custom_call.1}
  #allocation0 [shape = 'u32[]', space=smem, size = 0x4, offset = 0x4, fixed_abs, tag = 'smem constant byte address 0x4 - core index']
  #allocation1 [shape = 'u32[144,128]{1,0:T(1,128)}', space=vmem, size = 0x12000, scoped, tag = 'internal scratch']
  #allocation2 [shape = 'f32[1]{0:T(128)S(6)}', space=smem, size = 0x200, scoped, tag = 'scoped memory for tpu_custom_call.1']
  %s0 = inlined_call_operand.hbm [shape: f32[16,32], index: 0, kind: input, shape index: {}]
  %s1 = inlined_call_operand.vmem [shape: f32[1,32], index: 1, kind: input, shape index: {}]
  %s2 = inlined_call_operand.<no memory space> [shape: f32[1], index: 2, kind: input, shape index: {}]
  %s3 = inlined_call_operand.vmem [shape: f32[16,1], index: 3, kind: output, shape index: {}]
  %s4 = sld [smem:[#allocation0]]
  $region49: #{tpu_custom_call.1} parent=0
    _
  %s6 = ssub.s32 1, %s4
  %s7 = scalar_select 0, %s6, %s4
  %8 = sst [smem:[#allocation2]] %s2
  $region1: #{tpu_custom_call.1} parent=0
    #allocation3 [shape = 'u8[8192]{0}', space=vmem, size = 0x2000, scoped, tag = 'input window, operand 0']
    #allocation4 [shape = 's32[2]{0}', space=sflag, size = 0x8, scoped, tag = 'scoped memory for tpu_custom_call.1']
    %9 = vsyncpa [#allocation4], 0
    %s10 = scalar_lea.sflag [#allocation4], 1
    %11 = vsyncpa %s10, 0
    loop: start=0, step=1, limit=4
    $region2: #{tpu_custom_call.1} parent=1 // loop_pre_header
      _
    $region3: #{tpu_custom_call.1} parent=1 // loop_header
      %s13 = sphi 0, %s17
      %p14 = scmp.ge.s32.totalorder %s13, 4
      %s23 = sphi 0, %s25
      %s26 = sphi 0, %s23
      %s27 = sphi 0, %s26
      %s43 = sphi 0, %s27
      %s47 = sphi 0, %s47
      %s49 = sphi 0, %s47
      %s50 = sphi 0, %s49
      %s64 = sphi 0, %s50
      %s68 = sphi 0, %s68
      %s70 = sphi 0, %s68
      %s71 = sphi 0, %s70
      %s85 = sphi 0, %s71
      %s91 = sphi 0, %s93
      %s94 = sphi 0, %s91
      %s95 = sphi 0, %s94
      %s111 = sphi 0, %s95
    $region4: #{tpu_custom_call.1} parent=1 // loop_header_branch
      %16 = sbr.rel (%p14) target = $region8
    $region5: #{tpu_custom_call.1} parent=1 // loop_body
      %s18 = ssub.s32 %s13, 1
      %s19 = ssub.s32 %s13, 2
      %s20 = sadd.s32 %s13, 1
      %s21 = ssub.s32 %s13, %s20
      %p22 = scmp.eq.s32.totalorder %s21, 0
      %s24 = sadd.s32 %s23, 1
      %s25 = scalar_select %p22, %s23, %s24
      %p28 = pneg %p22
      %p29 = scmp.eq.s32.totalorder %s13, 1
      %p30 = por %p28, %p29
      %p31 = scmp.ne.s32.totalorder %s23, %s26
      %p32 = scmp.eq.s32.totalorder %s13, 0
      %p33 = por %p31, %p32
      %p34 = scmp.ne.s32.totalorder %s23, %s26
      %p35 = scmp.eq.s32.totalorder %s18, 1
      %p36 = por %p34, %p35
      %p37 = scmp.ne.s32.totalorder %s26, %s27
      %p38 = scmp.eq.s32.totalorder %s18, 0
      %p39 = por %p37, %p38
      %p40 = scmp.ne.s32.totalorder %s26, %s27
      %p41 = scmp.eq.s32.totalorder %s19, 1
      %p42 = por %p40, %p41
      %p44 = scmp.ne.s32.totalorder %s27, %s43
      %p45 = scmp.eq.s32.totalorder %s19, 0
      %p46 = por %p44, %p45
      %s48 = sadd.s32 %s47, 1
      %p51 = scmp.eq.s32.totalorder %s13, 1
      %p52 = scmp.ne.s32.totalorder %s47, %s49
      %p53 = scmp.eq.s32.totalorder %s13, 0
      %p54 = por %p52, %p53
      %p55 = scmp.ne.s32.totalorder %s47, %s49
      %p56 = scmp.eq.s32.totalorder %s18, 1
      %p57 = por %p55, %p56
      %p58 = scmp.ne.s32.totalorder %s49, %s50
      %p59 = scmp.eq.s32.totalorder %s18, 0
      %p60 = por %p58, %p59
      %p61 = scmp.ne.s32.totalorder %s49, %s50
      %p62 = scmp.eq.s32.totalorder %s19, 1
      %p63 = por %p61, %p62
      %p65 = scmp.ne.s32.totalorder %s50, %s64
      %p66 = scmp.eq.s32.totalorder %s19, 0
      %p67 = por %p65, %p66
      %s69 = sadd.s32 %s68, 1
      %p72 = scmp.eq.s32.totalorder %s13, 1
      %p73 = scmp.ne.s32.totalorder %s68, %s70
      %p74 = scmp.eq.s32.totalorder %s13, 0
      %p75 = por %p73, %p74
      %p76 = scmp.ne.s32.totalorder %s68, %s70
      %p77 = scmp.eq.s32.totalorder %s18, 1
      %p78 = por %p76, %p77
      %p79 = scmp.ne.s32.totalorder %s70, %s71
      %p80 = scmp.eq.s32.totalorder %s18, 0
      %p81 = por %p79, %p80
      %p82 = scmp.ne.s32.totalorder %s70, %s71
      %p83 = scmp.eq.s32.totalorder %s19, 1
      %p84 = por %p82, %p83
      %p86 = scmp.ne.s32.totalorder %s71, %s85
      %p87 = scmp.eq.s32.totalorder %s19, 0
      %p88 = por %p86, %p87
      %s89 = ssub.s32 %s13, %s20
      %p90 = scmp.eq.s32.totalorder %s89, 0
      %s92 = sadd.s32 %s91, 1
      %s93 = scalar_select %p90, %s91, %s92
      %p96 = pneg %p90
      %p97 = scmp.eq.s32.totalorder %s13, 1
      %p98 = por %p96, %p97
      %p99 = scmp.ne.s32.totalorder %s91, %s94
      %p100 = scmp.eq.s32.totalorder %s13, 0
      %p101 = por %p99, %p100
      %p102 = scmp.ne.s32.totalorder %s91, %s94
      %p103 = scmp.eq.s32.totalorder %s18, 1
      %p104 = por %p102, %p103
      %p105 = scmp.ne.s32.totalorder %s94, %s95
      %p106 = scmp.eq.s32.totalorder %s18, 0
      %p107 = por %p105, %p106
      %p108 = scmp.ne.s32.totalorder %s94, %s95
      %p109 = scmp.eq.s32.totalorder %s19, 1
      %p110 = por %p108, %p109
      %p112 = scmp.ne.s32.totalorder %s95, %s111
      %p113 = scmp.eq.s32.totalorder %s19, 0
      %p114 = por %p112, %p113
      %p115 = scmp.le.s32.totalorder 1, %s13
      %p116 = scmp.lt.s32.totalorder %s13, 3
      %p117 = pnand %p115, %p116
      %p118 = pneg %p117
      // Predicated region
      $region9: #{tpu_custom_call.1} parent=5 // pred_check
        _
      $region10: #{tpu_custom_call.1} parent=5 // pred_check_branch
        %120 = sbr.rel (%p117) target = $region12
      $region11: #{tpu_custom_call.1} parent=5 // pred_region
        %s121 = ssub.s32 %s13, 1
        // Predicated region
        $region13: #{tpu_custom_call.1} parent=11 // pred_check
          %p122 = pneg %p60
        $region14: #{tpu_custom_call.1} parent=11 // pred_check_branch
          %124 = sbr.rel (%p122) target = $region16
        $region15: #{tpu_custom_call.1} parent=11 // pred_region
          _
        $region16: #{tpu_custom_call.1} parent=11 // pred_fallthru
          _
        // Predicated region
        $region17: #{tpu_custom_call.1} parent=11 // pred_check
          %p125 = pneg %p81
        $region18: #{tpu_custom_call.1} parent=11 // pred_check_branch
          %127 = sbr.rel (%p125) target = $region20
        $region19: #{tpu_custom_call.1} parent=11 // pred_region
          _
        $region20: #{tpu_custom_call.1} parent=11 // pred_fallthru
          _
      $region12: #{tpu_custom_call.1} parent=5 // pred_fallthru
        _
      %p128 = scmp.lt.s32.totalorder %s13, 2
      // Predicated region
      $region21: #{tpu_custom_call.1} parent=5 // pred_check
        %p129 = pneg %p128
      $region22: #{tpu_custom_call.1} parent=5 // pred_check_branch
        %131 = sbr.rel (%p129) target = $region24
      $region23: #{tpu_custom_call.1} parent=5 // pred_region
        // Predicated region
        $region25: #{tpu_custom_call.1} parent=23 // pred_check
          %p132 = pneg %p33
        $region26: #{tpu_custom_call.1} parent=23 // pred_check_branch
          %134 = sbr.rel (%p132) target = $region28
        $region27: #{tpu_custom_call.1} parent=23 // pred_region
          %s135 = sand.u32 %s23, 1
          %s136 = scalar_lea.sflag [#allocation4], %s135
          %s137 = sand.u32 %s23, 1
          %s138 = smul.addr %s137, 8
          %s139 = scalar_lea.vmem [#allocation3], %s138
          %s141 = ssub.s32 128, 128
          %142 = vsyncadd %s136, %s141
          %s143 = smul.addr %s13, 128
          %s144 = scalar_lea.hbm %s0, %s143
          %s146 = sshll.u32 %s139, 4
          %s147 = int_to_ptr.vmem [resolvable:$true] %s146
          %149 = dma.hbm_to_vmem [thread:$0]  %s144, 128, %s147, %s136
        $region28: #{tpu_custom_call.1} parent=23 // pred_fallthru
          _
      $region24: #{tpu_custom_call.1} parent=5 // pred_fallthru
        _
      %p150 = scmp.le.s32.totalorder 1, %s13
      %p151 = scmp.lt.s32.totalorder %s13, 3
      %p152 = pnand %p150, %p151
      %p153 = pneg %p152
      // Predicated region
      $region29: #{tpu_custom_call.1} parent=5 // pred_check
        _
      $region30: #{tpu_custom_call.1} parent=5 // pred_check_branch
        %155 = sbr.rel (%p152) target = $region32
      $region31: #{tpu_custom_call.1} parent=5 // pred_region
        %s156 = ssub.s32 %s13, 1
        %s157 = sand.u32 %s26, 1
        %s158 = scalar_lea.sflag [#allocation4], %s157
        %s159 = sand.u32 %s26, 1
        %s160 = smul.addr %s159, 8
        %s161 = scalar_lea.vmem [#allocation3], %s160
        // Predicated region
        $region33: #{tpu_custom_call.1} parent=31 // pred_check
          %p162 = pneg %p39
        $region34: #{tpu_custom_call.1} parent=31 // pred_check_branch
          %164 = sbr.rel (%p162) target = $region36
        $region35: #{tpu_custom_call.1} parent=31 // pred_region
          %165 = dma.done %s158, 128
        $region36: #{tpu_custom_call.1} parent=31 // pred_fallthru
          _
        %s166 = sand.u32 %s26, 1
        %s167 = scalar_lea.sflag [#allocation4], %s166
        %s168 = sand.u32 %s26, 1
        %s169 = smul.addr %s168, 8
        %s170 = scalar_lea.vmem [#allocation3], %s169
        %p171 = pneg %p39
        %p172 = pneg %p36
        %p173 = pneg %p60
        %p174 = pneg %p57
        %p175 = pneg %p81
        %p176 = pneg %p78
        %p177 = pneg %p107
        %p178 = pneg %p104
        %p179 = scmp.lt.s32.totalorder %s18, 1
        %s180 = scalar_select %p179, %s18, 1
        %s181 = smul.addr %s180, 8
        %s182 = scalar_lea.vmem %s3, %s181
        %p183 = scmp.lt.s32.totalorder %s18, 1
        %s184 = scalar_select %p183, %s18, 1
        %s185 = smul.addr %s184, 8
        %s186 = scalar_lea.vmem %s3, %s185
        %v187 = vld [vmem:[%s161] sm:$0xff]
        %v188 = vld [vmem:[%s1] sm:$0x1]
        %v190 = vlaneseq
        %v191 = vshrl.u32 %v190, 7
        %v192 = vsub.s32 0, %v191
        %v193 = vrot.slane %v188, %v192
        %v195 = vmul.f32 %v187, %v193
        %vm196 = vcmask 261120
        %v197 = vsel %vm196, %v195, 0.0
        %198 = vadd.xlane.f32.xlu0 %v197
        %v199 = vpop.xlane.xlu0 %198
        %s200 = sld [smem:[#allocation2]]
        %v201 = vstv %s200
        %v202 = vadd.f32 %v199, %v201
        %v203 = vxor.u32 %v202, 2147483648
        %v204 = vmul.f32 %v203, 1.442695
        %v205 = vpow.pop %v204
        %v206 = vadd.f32 %v205, 1.0
        %v207 = vrcp.pop %v206
        %v208 = vmul.f32 1.0, %v207
        %vm209 = vcmask 7168
        %210 = vst.msk [vmem:[%s186] sm:$0xff] %vm209, %v208
        %p211 = scmp.lt.s32.totalorder %s18, 1
        %s212 = scalar_select %p211, %s18, 1
        %s213 = smul.addr %s212, 8
        %s214 = scalar_lea.vmem %s3, %s213
        // Predicated region
        $region37: #{tpu_custom_call.1} parent=31 // pred_check
          %p215 = pneg %p104
        $region38: #{tpu_custom_call.1} parent=31 // pred_check_branch
          %217 = sbr.rel (%p215) target = $region40
        $region39: #{tpu_custom_call.1} parent=31 // pred_region
          _
        $region40: #{tpu_custom_call.1} parent=31 // pred_fallthru
          _
      $region32: #{tpu_custom_call.1} parent=5 // pred_fallthru
        _
      %p218 = scmp.le.s32.totalorder 2, %s13
      // Predicated region
      $region41: #{tpu_custom_call.1} parent=5 // pred_check
        %p219 = pneg %p218
      $region42: #{tpu_custom_call.1} parent=5 // pred_check_branch
        %221 = sbr.rel (%p219) target = $region44
      $region43: #{tpu_custom_call.1} parent=5 // pred_region
        %s222 = ssub.s32 %s13, 2
        // Predicated region
        $region45: #{tpu_custom_call.1} parent=43 // pred_check
          %p223 = pneg %p110
        $region46: #{tpu_custom_call.1} parent=43 // pred_check_branch
          %225 = sbr.rel (%p223) target = $region48
        $region47: #{tpu_custom_call.1} parent=43 // pred_region
          %p226 = scmp.lt.s32.totalorder %s19, 1
          %s227 = scalar_select %p226, %s19, 1
          %s228 = smul.addr %s227, 8
          %s229 = scalar_lea.vmem %s3, %s228
        $region48: #{tpu_custom_call.1} parent=43 // pred_fallthru
          _
      $region44: #{tpu_custom_call.1} parent=5 // pred_fallthru
        _
    $region6: #{tpu_custom_call.1} parent=1 // loop_footer
      %s17 = sadd.s32 1, %s13
    $region7: #{tpu_custom_call.1} parent=1 // loop_footer_branch
      %12 = sbr.rel target = $region3
    $region8: #{tpu_custom_call.1} parent=1 // loop_exit
      _
    %230 = vsyncpa [#allocation4], 1
    %s231 = scalar_lea.sflag [#allocation4], 1
    %232 = vsyncpa %s231, 1

</llo_original>
